<compile_context>
chip_gen: v7x
topology: tpu7x:2x2x1
jax: 0.10.0
libtpu: 0.0.40
codegen_flags: <defaults>
</compile_context>

<pallas_src>
import jax
import jax.numpy as jnp
from jax.experimental import pallas as pl
from jax.experimental.pallas import tpu as pltpu

K = 10
FEATURE_DIM = K * 3     # 30
H1 = 32                 # Linear(30,32) / Conv1d out channels
H2 = 16                 # Linear(32,16)
PI_DIM = 1              # last_layer_dim_pi
VF_DIM = 1              # last_layer_dim_vf
OUT_COLS = H1 + VF_DIM  # 33 fused output columns (32 policy + 1 value)


def _net_kernel(x_ref, w_ref, b_ref, pi_ref, vf_ref):
    x = x_ref[...]                                                  # (bt, 30)
    y = jnp.dot(x, w_ref[...],
                preferred_element_type=jnp.float32) + b_ref[...]    # (bt, 33)
    pi_ref[...] = jnp.maximum(y[:, :H1], 0.0)                       # (bt, 32) lane-dense store
    vf_ref[...] = jnp.tanh(y[:, H1:OUT_COLS])                       # (bt, 1)


def _round_up(n, m):
    return ((n + m - 1) // m) * m


def custom_network_hard(features, params, *, batch_tile=512):
    """features: (B, 1, FEATURE_DIM) float32 -> (pi (B, 32, 1), vf (B, 1, 1))."""
    B = features.shape[0]
    x = features.reshape(B, FEATURE_DIM).astype(jnp.float32)
    (w1, b1, wc, bc, w2, b2, w3, b3, vw1, vb1, vw2, vb2, vw3, vb3) = params

    # ---- trace-time algebraic collapse of the affine chains ----
    # Policy: h3[b,o] = x[b] . (g * wc[o]) + (wc[o]*z0 + bc[o]*s + d)
    wc_vec = wc.reshape(H1)                          # conv weight (32,)
    u = w2.T @ w3[0]                                 # (32,)   w2.T @ w3.T
    g = w1.T @ u                                     # (30,)
    z0 = b1 @ u                                      # scalar
    s = jnp.sum(u)                                   # scalar
    d = b2 @ w3[0] + b3[0]                           # scalar
    w_pi = g[:, None] * wc_vec[None, :]              # (30, 32)
    b_pi = wc_vec * z0 + bc * s + d                  # (32,)

    # Value: v3 = x @ (vw1.T @ vw2.T @ vw3.T) + collapsed bias
    w_vf = vw1.T @ vw2.T @ vw3.T                     # (30, 1)
    b_vf = (vb1 @ vw2.T + vb2) @ vw3.T + vb3         # (1,)

    w_all = jnp.concatenate([w_pi, w_vf], axis=1)    # (30, 33)
    b_all = jnp.concatenate([b_pi, b_vf])[None, :]   # (1, 33)

    # ---- batch tiling: sublane-aligned tiles, parallel grid over batch ----
    bt = min(batch_tile, _round_up(B, 8))
    B_pad = _round_up(B, bt)
    if B_pad != B:
        x = jnp.pad(x, ((0, B_pad - B), (0, 0)))
    grid = (B_pad // bt,)

    pi, vf = pl.pallas_call(
        _net_kernel,
        out_shape=(jax.ShapeDtypeStruct((B_pad, H1), jnp.float32),
                   jax.ShapeDtypeStruct((B_pad, VF_DIM), jnp.float32)),
        grid=grid,
        in_specs=[
            pl.BlockSpec((bt, FEATURE_DIM), lambda i: (i, 0)),
            pl.BlockSpec((FEATURE_DIM, OUT_COLS), lambda i: (0, 0)),  # weights resident in VMEM
            pl.BlockSpec((1, OUT_COLS), lambda i: (0, 0)),            # bias resident in VMEM
        ],
        out_specs=(pl.BlockSpec((bt, H1), lambda i: (i, 0)),
                   pl.BlockSpec((bt, VF_DIM), lambda i: (i, 0))),
        compiler_params=pltpu.CompilerParams(
            dimension_semantics=("parallel",)),
    )(x, w_all, b_all)

    pi = pi[:B].reshape(B, H1, PI_DIM)   # matches torch policy output (B, 32, 1)
    vf = vf[:B].reshape(B, 1, VF_DIM)    # matches torch value  output (B, 1, 1)
    return pi, vf


def init_params(key):
    """Deterministic PyTorch-style uniform(-1/sqrt(fan_in), +) init."""
    def linear(k, out_dim, in_dim):
        k1, k2 = jax.random.split(k)
        bound = 1.0 / (in_dim ** 0.5)
        w = jax.random.uniform(k1, (out_dim, in_dim), jnp.float32, -bound, bound)
        b = jax.random.uniform(k2, (out_dim,), jnp.float32, -bound, bound)
        return w, b

    ks = jax.random.split(key, 7)
    w1, b1 = linear(ks[0], H1, FEATURE_DIM)      # policy Linear(30,32)
    wc, bc = linear(ks[1], H1, 1)                # Conv1d(1,32,1): weight (32,1), bias (32,)
    w2, b2 = linear(ks[2], H2, H1)               # Linear(32,16)
    w3, b3 = linear(ks[3], PI_DIM, H2)           # Linear(16,1)
    vw1, vb1 = linear(ks[4], H1, FEATURE_DIM)    # value Linear(30,32)
    vw2, vb2 = linear(ks[5], H2, H1)             # Linear(32,16)
    vw3, vb3 = linear(ks[6], VF_DIM, H2)         # Linear(16,1)
    return (w1, b1, wc, bc, w2, b2, w3, b3, vw1, vb1, vw2, vb2, vw3, vb3)


def reference(features, params):
    """Pure-JAX replica of the (un-collapsed) PyTorch forward, for correctness."""
    w1, b1, wc, bc, w2, b2, w3, b3, vw1, vb1, vw2, vb2, vw3, vb3 = params
    x = features                                              # (B, 1, 30)
    h1 = x @ w1.T + b1                                        # (B, 1, 32)
    hc = h1 * wc.reshape(1, H1, 1) + bc.reshape(1, H1, 1)     # Conv1d -> (B, 32, 32)
    h2 = hc @ w2.T + b2                                       # (B, 32, 16)
    h3 = h2 @ w3.T + b3                                       # (B, 32, 1)
    pi = jnp.maximum(h3, 0.0)
    v1 = x @ vw1.T + vb1                                      # (B, 1, 32)
    v2 = v1 @ vw2.T + vb2                                     # (B, 1, 16)
    v3 = v2 @ vw3.T + vb3                                     # (B, 1, 1)
    vf = jnp.tanh(v3)
    return pi, vf


if __name__ == "__main__":
    key = jax.random.PRNGKey(0)
    k_feat, k_par = jax.random.split(key)

    B = 2
    features = jax.random.normal(k_feat, (B, 1, FEATURE_DIM), jnp.float32)
    params = init_params(k_par)

    pi, vf = custom_network_hard(features, params)
    jax.block_until_ready((pi, vf))

    pi_ref, vf_ref = reference(features, params)
    assert pi.shape == (B, H1, PI_DIM) and vf.shape == (B, 1, VF_DIM)
    assert jnp.allclose(pi, pi_ref, atol=1e-5, rtol=1e-5)
    assert jnp.allclose(vf, vf_ref, atol=1e-5, rtol=1e-5)

    print("KERNEL_OK")
</pallas_src>

<mosaic_0001>
module attributes {stable_mosaic.version = 11 : i64} {
  func.func @_net_kernel(%arg0: i32, %arg1: memref<8x30xf32, #tpu.memory_space<vmem>>, %arg2: memref<30x33xf32, #tpu.memory_space<vmem>>, %arg3: memref<1x33xf32, #tpu.memory_space<vmem>>, %arg4: memref<8x32xf32, #tpu.memory_space<vmem>>, %arg5: memref<8x1xf32, #tpu.memory_space<vmem>>) attributes {dimension_semantics = [#tpu.dimension_semantics<parallel>], iteration_bounds = array<i64: 1>, scalar_prefetch = 0 : i64, scratch_operands = 0 : i64, tpu.core_type = #tpu.core_type<tc>, window_params = [{transform_indices = @transform_0, window_bounds = array<i64: 8, 30>}, {pipeline_mode = #tpu.pipeline_mode<synchronous>, transform_indices = @transform_1, window_bounds = array<i64: 30, 33>}, {pipeline_mode = #tpu.pipeline_mode<synchronous>, transform_indices = @transform_2, window_bounds = array<i64: 1, 33>}, {transform_indices = @transform_3, window_bounds = array<i64: 8, 32>}, {transform_indices = @transform_4, window_bounds = array<i64: 8, 1>}]} {
    %c0 = arith.constant 0 : index
    %c0_0 = arith.constant 0 : index
    %0 = vector.load %arg1[%c0, %c0_0] : memref<8x30xf32, #tpu.memory_space<vmem>>, vector<8x30xf32>
    %c0_1 = arith.constant 0 : index
    %c0_2 = arith.constant 0 : index
    %1 = vector.load %arg2[%c0_1, %c0_2] : memref<30x33xf32, #tpu.memory_space<vmem>>, vector<30x33xf32>
    %cst = arith.constant dense<0.000000e+00> : vector<8x33xf32>
    %2 = tpu.matmul %0, %1, %cst {dimension_numbers = #tpu.dot_dimension_numbers<[1], [0], [0], [1], [0, 0, 1, 1], [], []>} : vector<8x30xf32>, vector<30x33xf32>, vector<8x33xf32> -> vector<8x33xf32>
    %c0_3 = arith.constant 0 : index
    %c0_4 = arith.constant 0 : index
    %3 = vector.load %arg3[%c0_3, %c0_4] : memref<1x33xf32, #tpu.memory_space<vmem>>, vector<1x33xf32>
    %4 = vector.broadcast %3 : vector<1x33xf32> to vector<8x33xf32>
    %5 = arith.addf %2, %4 : vector<8x33xf32>
    %6 = vector.extract_strided_slice %5 {offsets = [0, 0], sizes = [8, 32], strides = [1, 1]} : vector<8x33xf32> to vector<8x32xf32>
    %cst_5 = arith.constant 0.000000e+00 : f32
    %7 = vector.broadcast %cst_5 : f32 to vector<8x32xf32>
    %8 = arith.maximumf %6, %7 : vector<8x32xf32>
    %c0_6 = arith.constant 0 : index
    %c0_7 = arith.constant 0 : index
    %9 = vector.load %arg4[%c0_6, %c0_7] : memref<8x32xf32, #tpu.memory_space<vmem>>, vector<8x32xf32>
    tpu.vector_store %arg4[%c0_6, %c0_7], %8 {strides = array<i32>} : memref<8x32xf32, #tpu.memory_space<vmem>>, vector<8x32xf32>,
    %10 = vector.extract_strided_slice %5 {offsets = [0, 32], sizes = [8, 1], strides = [1, 1]} : vector<8x33xf32> to vector<8x1xf32>
    %11 = math.tanh %10 : vector<8x1xf32>
    %c0_8 = arith.constant 0 : index
    %c0_9 = arith.constant 0 : index
    %12 = vector.load %arg5[%c0_8, %c0_9] : memref<8x1xf32, #tpu.memory_space<vmem>>, vector<8x1xf32>
    tpu.vector_store %arg5[%c0_8, %c0_9], %11 {strides = array<i32>} : memref<8x1xf32, #tpu.memory_space<vmem>>, vector<8x1xf32>,
    return
  }
  func.func @transform_0(%arg0: i32) -> (i32, i32) {
    %c0_i32 = arith.constant 0 : i32
    %c0_i32_0 = arith.constant 0 : i32
    return %arg0, %c0_i32 : i32, i32
  }
  func.func @transform_1(%arg0: i32) -> (i32, i32) {
    %c0_i32 = arith.constant 0 : i32
    %c0_i32_0 = arith.constant 0 : i32
    %c0_i32_1 = arith.constant 0 : i32
    return %c0_i32, %c0_i32_0 : i32, i32
  }
  func.func @transform_2(%arg0: i32) -> (i32, i32) {
    %c0_i32 = arith.constant 0 : i32
    %c0_i32_0 = arith.constant 0 : i32
    %c0_i32_1 = arith.constant 0 : i32
    return %c0_i32, %c0_i32_0 : i32, i32
  }
  func.func @transform_3(%arg0: i32) -> (i32, i32) {
    %c0_i32 = arith.constant 0 : i32
    %c0_i32_0 = arith.constant 0 : i32
    return %arg0, %c0_i32 : i32, i32
  }
  func.func @transform_4(%arg0: i32) -> (i32, i32) {
    %c0_i32 = arith.constant 0 : i32
    %c0_i32_0 = arith.constant 0 : i32
    return %arg0, %c0_i32 : i32, i32
  }
}

</mosaic_0001>

<llo_original>
// kernel: tpu_custom_call.1
$region0: #{tpu_custom_call.1}
  #allocation0 [shape = 'u32[]', space=smem, size = 0x4, offset = 0x4, fixed_abs, tag = 'smem constant byte address 0x4 - core index']
  #allocation1 [shape = 'u32[144,128]{1,0:T(1,128)}', space=vmem, size = 0x12000, scoped, tag = 'internal scratch']
  %s0 = inlined_call_operand.hbm [shape: f32[8,30], index: 0, kind: input, shape index: {}]
  %s1 = inlined_call_operand.hbm [shape: f32[30,33], index: 1, kind: input, shape index: {}]
  %s2 = inlined_call_operand.vmem [shape: f32[1,33], index: 2, kind: input, shape index: {}]
  %s3 = inlined_call_operand.hbm [shape: f32[8,32], index: 3, kind: output, shape index: {0}]
  %s4 = inlined_call_operand.vmem [shape: f32[8,1], index: 4, kind: output, shape index: {1}]
  %5 = xla_tuple %s3, %s4
  %s6 = sld [smem:[#allocation0]]
  $region38: #{tpu_custom_call.1} parent=0
    _
  %s8 = ssub.s32 1, %s6
  %s9 = scalar_select 0, %s8, %s6
  $region1: #{tpu_custom_call.1} parent=0
    #allocation2 [shape = 'u8[4096]{0}', space=vmem, size = 0x1000, scoped, tag = 'input window, operand 0, single buffered']
    #allocation3 [shape = 's32[1]{0}', space=sflag, size = 0x4, scoped, tag = 'scoped memory for tpu_custom_call.1']
    #allocation4 [shape = 's32[1]{0}', space=sflag, size = 0x4, scoped, tag = 'scoped memory for tpu_custom_call.1']
    #allocation5 [shape = 'u8[16384]{0}', space=vmem, size = 0x4000, scoped, tag = 'input window, operand 1, single buffered']
    #allocation6 [shape = 's32[1]{0}', space=sflag, size = 0x4, scoped, tag = 'scoped memory for tpu_custom_call.1']
    #allocation7 [shape = 'u8[4096]{0}', space=vmem, size = 0x1000, scoped, tag = 'output window, operand 0, single buffered']
    %10 = vsyncpa [#allocation3], 0
    %11 = vsyncpa [#allocation6], 0
    %12 = vsyncpa [#allocation4], 0
    // Predicated region
    $region2: #{tpu_custom_call.1} parent=1 // pred_check
      _
    $region3: #{tpu_custom_call.1} parent=1 // pred_check_branch
      %14 = sbr.rel (0) target = $region5
    $region4: #{tpu_custom_call.1} parent=1 // pred_region
      %s16 = ssub.s32 128, 128
      %17 = vsyncadd [#allocation3], %s16
      %s19 = sshll.u32 [#allocation2], 4
      %s20 = int_to_ptr.vmem [resolvable:$true] %s19
      %22 = dma.hbm_to_vmem [thread:$0]  %s0, 128, %s20, [#allocation3]
    $region5: #{tpu_custom_call.1} parent=1 // pred_fallthru
      _
    // Predicated region
    $region6: #{tpu_custom_call.1} parent=1 // pred_check
      _
    $region7: #{tpu_custom_call.1} parent=1 // pred_check_branch
      %24 = sbr.rel (0) target = $region9
    $region8: #{tpu_custom_call.1} parent=1 // pred_region
      %s26 = ssub.s32 512, 512
      %27 = vsyncadd [#allocation6], %s26
      %s28 = sshll.u32 [#allocation5], 4
      %s29 = int_to_ptr.vmem [resolvable:$true] %s28
      %34 = dma.hbm_to_vmem [thread:$0]  %s1, 512, %s29, [#allocation6], 128, 128, 8
    $region9: #{tpu_custom_call.1} parent=1 // pred_fallthru
      _
    // Predicated region
    $region10: #{tpu_custom_call.1} parent=1 // pred_check
      _
    $region11: #{tpu_custom_call.1} parent=1 // pred_check_branch
      %36 = sbr.rel (0) target = $region13
    $region12: #{tpu_custom_call.1} parent=1 // pred_region
      _
    $region13: #{tpu_custom_call.1} parent=1 // pred_fallthru
      _
    // Predicated region
    $region14: #{tpu_custom_call.1} parent=1 // pred_check
      _
    $region15: #{tpu_custom_call.1} parent=1 // pred_check_branch
      %38 = sbr.rel (0) target = $region17
    $region16: #{tpu_custom_call.1} parent=1 // pred_region
      %39 = dma.done [#allocation3], 128
    $region17: #{tpu_custom_call.1} parent=1 // pred_fallthru
      _
    // Predicated region
    $region18: #{tpu_custom_call.1} parent=1 // pred_check
      _
    $region19: #{tpu_custom_call.1} parent=1 // pred_check_branch
      %41 = sbr.rel (0) target = $region21
    $region20: #{tpu_custom_call.1} parent=1 // pred_region
      %42 = dma.done [#allocation6], 512
    $region21: #{tpu_custom_call.1} parent=1 // pred_fallthru
      _
    %v43 = vld [vmem:[#allocation2] sm:$0xff]
    %v44 = vld [vmem:[#allocation5] sm:$0xff]
    %v45 = vld [vmem:[#allocation5 + $0x8] sm:$0xff]
    %v46 = vld [vmem:[#allocation5 + $0x10] sm:$0xff]
    %v47 = vld [vmem:[#allocation5 + $0x18] sm:$0x3f]
    %v48 = vld [vmem:[%s2] sm:$0x1]
    %v50 = vlaneseq
    %v51 = vshrl.u32 %v50, 7
    %v52 = vsub.s32 0, %v51
    %v53 = vrot.slane %v48, %v52
    %vm55 = vcmask 244736
    %v57 = vsel %vm55, %v43, 0
    %vm59 = vcmask 1045504
    %v61 = vsel %vm59, %v47, 0
    %63 = vmatprep.subr.mxu0 0.0
    %64 = vmatpush1.msra.mxu0 %v44
    %65 = vmatprep.subr.mxu0 0.0
    %66 = vmatpush1.msra.mxu0 %v45
    %67 = vmatprep.subr.mxu0 0.0
    %68 = vmatpush1.msra.mxu0 %v46
    %69 = vmatprep.subr.mxu0 0.0
    %70 = vmatpush1.msra.mxu0 %v61
    %71 = vmatprep.subr.mxu0 0.0
    %72 = vmatpush1.msra.mxu0 0.0
    %73 = vmatprep.subr.mxu0 0.0
    %74 = vmatpush1.msra.mxu0 0.0
    %75 = vmatprep.subr.mxu0 0.0
    %76 = vmatpush1.msra.mxu0 0.0
    %77 = vmatprep.subr.mxu0 0.0
    %78 = vmatpush1.msra.mxu0 0.0
    %79 = vmatprep.subr.mxu0 0.0
    %80 = vmatpush1.msra.mxu0 0.0
    %81 = vmatprep.subr.mxu0 0.0
    %82 = vmatpush1.msra.mxu0 0.0
    %83 = vmatprep.subr.mxu0 0.0
    %84 = vmatpush1.msra.mxu0 0.0
    %85 = vmatprep.subr.mxu0 0.0
    %86 = vmatpush1.msra.mxu0 0.0
    %87 = vmatprep.subr.mxu0 0.0
    %88 = vmatpush1.msra.mxu0 0.0
    %89 = vmatprep.subr.mxu0 0.0
    %90 = vmatpush1.msra.mxu0 0.0
    %91 = vmatprep.subr.mxu0 0.0
    %92 = vmatpush1.msra.mxu0 0.0
    %93 = vmatprep.subr.mxu0 0.0
    %94 = vmatpush1.msra.mxu0 0.0
    %95 = vmatprep.subr.mxu0 0.0
    %96 = vmatpush1.msra.mxu0 0.0
    %97 = vmatprep.subr.mxu0 0.0
    %98 = vmatpush1.msra.mxu0 0.0
    %99 = vmatprep.subr.mxu0 0.0
    %100 = vmatpush1.msra.mxu0 0.0
    %101 = vmatprep.subr.mxu0 0.0
    %102 = vmatpush1.msra.mxu0 0.0
    %103 = vmatprep.subr.mxu0 0.0
    %104 = vmatpush1.msra.mxu0 0.0
    %105 = vmatprep.subr.mxu0 0.0
    %106 = vmatpush1.msra.mxu0 0.0
    %107 = vmatprep.subr.mxu0 0.0
    %108 = vmatpush1.msra.mxu0 0.0
    %109 = vmatprep.subr.mxu0 0.0
    %110 = vmatpush1.msra.mxu0 0.0
    %111 = vmatprep.subr.mxu0 0.0
    %112 = vmatpush1.msra.mxu0 0.0
    %113 = vmatprep.subr.mxu0 0.0
    %114 = vmatpush1.msra.mxu0 0.0
    %115 = vmatprep.subr.mxu0 0.0
    %116 = vmatpush1.msra.mxu0 0.0
    %117 = vmatprep.subr.mxu0 0.0
    %118 = vmatpush1.msra.mxu0 0.0
    %119 = vmatprep.subr.mxu0 0.0
    %120 = vmatpush1.msra.mxu0 0.0
    %121 = vmatprep.subr.mxu0 0.0
    %122 = vmatpush1.msra.mxu0 0.0
    %123 = vmatprep.subr.mxu0 0.0
    %124 = vmatpush1.msra.mxu0 0.0
    %125 = vmatprep.subr.mxu0 0.0
    %126 = vmatpush1.msra.mxu0 0.0
    %127 = vmatprep.mubr.f32.mxu0 0.0
    %128 = vmatmul.mubr.f32.gmra.mrb[0].mxu0 %v57
    %v129 = vpop.f32.mrb[0].mxu0
    %v130 = vadd.f32 %v53, %v129
    %v131 = vpop.f32.mrb[0].mxu0
    %132 = vdwg.mxu0
    %v133 = vmax.f32 %v130, 0.0
    %vm134 = vcmask 261120
    %135 = vst.msk [vmem:[#allocation7] sm:$0xff] %vm134, %v133
    %v136 = vtanh.pop %v130
    %138 = vrot.lane.b32.xlu0 %v136, 96
    %v139 = vpop.permute.xlu0 %138
    %vm141 = vcmask 7168
    %142 = vst.msk [vmem:[%s4] sm:$0xff] %vm141, %v139
    // Predicated region
    $region22: #{tpu_custom_call.1} parent=1 // pred_check
      _
    $region23: #{tpu_custom_call.1} parent=1 // pred_check_branch
      %144 = sbr.rel (0) target = $region25
    $region24: #{tpu_custom_call.1} parent=1 // pred_region
      %s146 = ssub.s32 128, 128
      %147 = vsyncadd [#allocation4], %s146
      %s149 = sshll.u32 [#allocation7], 4
      %s150 = int_to_ptr.vmem [resolvable:$true] %s149
      %152 = dma.vmem_to_hbm [thread:$0]  %s150, 128, %s3, [#allocation4]
    $region25: #{tpu_custom_call.1} parent=1 // pred_fallthru
      _
    // Predicated region
    $region26: #{tpu_custom_call.1} parent=1 // pred_check
      _
    $region27: #{tpu_custom_call.1} parent=1 // pred_check_branch
      %154 = sbr.rel (0) target = $region29
    $region28: #{tpu_custom_call.1} parent=1 // pred_region
      _
    $region29: #{tpu_custom_call.1} parent=1 // pred_fallthru
      _
    // Predicated region
    $region30: #{tpu_custom_call.1} parent=1 // pred_check
      _
    $region31: #{tpu_custom_call.1} parent=1 // pred_check_branch
      %156 = sbr.rel (0) target = $region33
    $region32: #{tpu_custom_call.1} parent=1 // pred_region
      %157 = dma.done [#allocation4], 128
    $region33: #{tpu_custom_call.1} parent=1 // pred_fallthru
      _
    // Predicated region
    $region34: #{tpu_custom_call.1} parent=1 // pred_check
      _
    $region35: #{tpu_custom_call.1} parent=1 // pred_check_branch
      %159 = sbr.rel (0) target = $region37
    $region36: #{tpu_custom_call.1} parent=1 // pred_region
      _
    $region37: #{tpu_custom_call.1} parent=1 // pred_fallthru
      _
    %160 = vsyncpa [#allocation3], 1
    %161 = vsyncpa [#allocation6], 1
    %162 = vsyncpa [#allocation4], 1

</llo_original>
